<compile_context>
chip_gen: v6e
topology: v6e:2x2x1
jax: 0.10.0
libtpu: 0.0.40
codegen_flags: <defaults>
</compile_context>

<pallas_src>
import functools
import math

import jax
import jax.numpy as jnp
from jax import lax
from jax.experimental import pallas as pl
from jax.experimental.pallas import tpu as pltpu


_SQRT_2_OVER_PI = 0.7978845608028654


def _gelu_tanh(x):
    # TODO(synk): HF "gelu" is the exact erf form; tanh approximation used for portable lowering.
    return 0.5 * x * (1.0 + jnp.tanh(_SQRT_2_OVER_PI * (x + 0.044715 * x * x * x)))


def _vmem_limit_bytes():
    # Raise the scoped-VMEM ceiling (v5e default is only 16 MiB) while staying well within the
    # physical capacity of the current chip generation (v7x has 64 MiB per TensorCore).
    try:
        cap = pltpu.get_tpu_info().vmem_capacity_bytes
        return int(cap * 3 // 4)
    except Exception:
        return 64 << 20   # explicit fallback; never leave v5e at its 16 MiB scoped default


_VMEM_LIMIT = _vmem_limit_bytes()


def _probe_buffered_single():
    """Check once whether pipeline_mode=pl.Buffered(1) lowers on this toolchain."""
    if not hasattr(pl, "Buffered"):
        return False
    try:
        spec = pl.BlockSpec((8, 128), lambda i: (0, 0), pipeline_mode=pl.Buffered(1))

        def _k(x_ref, o_ref):
            o_ref[...] = x_ref[...] + 1.0

        y = pl.pallas_call(
            _k,
            out_shape=jax.ShapeDtypeStruct((8, 128), jnp.float32),
            grid=(1,),
            in_specs=[spec],
            out_specs=pl.BlockSpec((8, 128), lambda i: (0, 0)),
        )(jnp.zeros((8, 128), jnp.float32))
        jax.block_until_ready(y)
        return bool(jnp.allclose(y, 1.0))
    except Exception:
        return False


_BUFFERED_1_OK = _probe_buffered_single()


def _resident_spec(block_shape):
    """Constant-index BlockSpec for operands resident across the row grid.

    Single-buffered (Buffered(1)) when supported, so an f32 BERT-large FFN weight costs
    16 MiB of VMEM instead of 32 MiB — the difference between fitting and not on v7x.
    """
    zeros = (0,) * len(block_shape)
    index_map = lambda *_: zeros
    if _BUFFERED_1_OK:
        try:
            return pl.BlockSpec(block_shape, index_map, pipeline_mode=pl.Buffered(1))
        except Exception:
            pass
    return pl.BlockSpec(block_shape, index_map)


def _default_row_tile():
    try:
        vmem = pltpu.get_tpu_info().vmem_capacity_bytes
    except Exception:
        vmem = 128 << 20
    if vmem <= (64 << 20):                 # v7x-class: 64 MiB per TensorCore
        return 384 if _BUFFERED_1_OK else 256
    return 512                             # v5e / v6e: 128 MiB physical VMEM


def _compiler_params(grid_rank=1):
    return pltpu.CompilerParams(
        dimension_semantics=("parallel",) * grid_rank,
        vmem_limit_bytes=_VMEM_LIMIT)


def _row_tiling(rows, want):
    """Pick a row tile.  Prefer (a) the full row count, or (b) a sublane-aligned divisor of
    `rows` (no pad / slice HBM round trip); only pad as a last resort."""
    want = max(8, min(int(want), rows))
    if rows <= want:
        return rows, rows
    t = want - (want % 8)
    while t >= 8:
        if rows % t == 0:
            return t, rows
        t -= 8
    t = max(want - (want % 8), 8)
    rows_pad = -(-rows // t) * t
    return t, rows_pad


# ---------------------------------------------------------------------------
# Kernels
# ---------------------------------------------------------------------------

def _dense_kernel(x_ref, w_ref, b_ref, o_ref, *, act):
    # x_ref: (tm, K) row tile; w_ref: (K, N) resident weight; b_ref: (1, N) f32.
    y = jnp.dot(x_ref[...], w_ref[...], preferred_element_type=jnp.float32)
    y = y + b_ref[...]
    if act == "gelu":
        y = _gelu_tanh(y)
    o_ref[...] = y.astype(o_ref.dtype)


def _dense_residual_ln_kernel(h_ref, x_ref, w_ref, b_ref, g_ref, beta_ref, o_ref, *, eps):
    # Dense -> (dropout = eval-mode identity) -> residual add -> LayerNorm over the hidden dim.
    # TODO(synk): training-mode dropout (pltpu.prng_random_bits mask) not implemented.
    y = jnp.dot(h_ref[...], w_ref[...], preferred_element_type=jnp.float32)
    z = y + b_ref[...] + x_ref[...].astype(jnp.float32)
    mean = jnp.mean(z, axis=-1, keepdims=True)
    cen = z - mean
    var = jnp.mean(cen * cen, axis=-1, keepdims=True)
    out = cen * lax.rsqrt(var + eps) * g_ref[...] + beta_ref[...]
    o_ref[...] = out.astype(o_ref.dtype)


def _ffn_kernel(x_ref, wi_ref, bi_ref, wo_ref, bo_ref, g_ref, beta_ref, o_ref, *, eps):
    # BertIntermediate + BertOutput fused: dense -> GELU -> dense -> (dropout=id) -> +res -> LN.
    # The (tile, 4H) GELU intermediate stays on-chip; no HBM round trip.
    x = x_ref[...]
    inter = jnp.dot(x, wi_ref[...], preferred_element_type=jnp.float32) + bi_ref[...]
    inter = _gelu_tanh(inter)
    y = jnp.dot(inter.astype(wo_ref.dtype), wo_ref[...], preferred_element_type=jnp.float32)
    z = y + bo_ref[...] + x.astype(jnp.float32)
    mean = jnp.mean(z, axis=-1, keepdims=True)
    cen = z - mean
    var = jnp.mean(cen * cen, axis=-1, keepdims=True)
    out = cen * lax.rsqrt(var + eps) * g_ref[...] + beta_ref[...]
    o_ref[...] = out.astype(o_ref.dtype)


def _attention_kernel(qkv_ref, m_ref, o_ref, *, num_heads, head_dim, scale):
    # One batch per grid step.  qkv_ref: (1, S, 3H) fused projection in token-major layout,
    # m_ref: (1, 1, S) additive mask, o_ref: (1, S, H) context written back in [B, S, H] layout
    # (lane-dense H-wide store instead of head-sliced dh-wide masked stores).
    # TODO(synk): flash-style KV tiling for long sequences; head_mask multiply and
    #             attention-prob dropout (eval identity) are not implemented.
    H = num_heads * head_dim
    m = m_ref[0]                                          # (1, S), broadcast over query rows
    ctx_heads = []
    for h in range(num_heads):
        lo = h * head_dim
        q = qkv_ref[0, :, lo:lo + head_dim] * scale       # scale Q, not the (S, S) scores
        k = qkv_ref[0, :, H + lo:H + lo + head_dim]
        v = qkv_ref[0, :, 2 * H + lo:2 * H + lo + head_dim]
        s = lax.dot_general(q, k, (((1,), (1,)), ((), ())),
                            preferred_element_type=jnp.float32)
        s = s + m
        s = s - jnp.max(s, axis=-1, keepdims=True)
        p = jnp.exp(s)
        denom = jnp.sum(p, axis=-1, keepdims=True)
        ctx = jnp.dot(p.astype(v.dtype), v, preferred_element_type=jnp.float32)
        # Deferred softmax normalization: S reciprocals + S*dh multiplies instead of S*S divides.
        # approx=True is cheaper still (EUP slot) but kept exact for tight parity with the ref.
        ctx = ctx * pl.reciprocal(denom, approx=False)
        ctx_heads.append(ctx)
    out = ctx_heads[0] if num_heads == 1 else jnp.concatenate(ctx_heads, axis=-1)
    o_ref[0] = out.astype(o_ref.dtype)


# ---------------------------------------------------------------------------
# Pallas-call wrappers
# ---------------------------------------------------------------------------

def _pallas_dense(x, w, b, *, act=None, row_tile=None):
    rows, K = x.shape
    N = w.shape[1]
    tile, rows_pad = _row_tiling(rows, row_tile if row_tile else _default_row_tile())
    if rows_pad != rows:
        x = jnp.pad(x, ((0, rows_pad - rows), (0, 0)))
    b2 = b.reshape(1, N).astype(jnp.float32)
    itemsize = x.dtype.itemsize
    cost = pl.CostEstimate(
        flops=2 * rows_pad * K * N,
        transcendentals=(rows_pad * N if act == "gelu" else 0),
        bytes_accessed=(rows_pad * K + rows_pad * N) * itemsize
                       + w.size * w.dtype.itemsize + N * 4)
    out = pl.pallas_call(
        functools.partial(_dense_kernel, act=act),
        out_shape=jax.ShapeDtypeStruct((rows_pad, N), x.dtype),
        grid_spec=pltpu.PrefetchScalarGridSpec(
            num_scalar_prefetch=0,
            grid=(rows_pad // tile,),
            in_specs=[
                pl.BlockSpec((tile, K), lambda i: (i, 0)),   # activation row tile
                _resident_spec((K, N)),                      # weight (resident, native dtype)
                _resident_spec((1, N)),                      # bias (f32, pre-cast)
            ],
            out_specs=pl.BlockSpec((tile, N), lambda i: (i, 0)),
        ),
        compiler_params=_compiler_params(1),
        cost_estimate=cost,
    )(x, w, b2)
    return out if rows_pad == rows else out[:rows]


def _pallas_dense_residual_ln(h, x, w, b, gamma, beta, *, eps, row_tile=None):
    rows, K = h.shape
    Hd = x.shape[1]
    tile, rows_pad = _row_tiling(rows, row_tile if row_tile else _default_row_tile())
    if rows_pad != rows:
        h = jnp.pad(h, ((0, rows_pad - rows), (0, 0)))
        x = jnp.pad(x, ((0, rows_pad - rows), (0, 0)))
    b2 = b.reshape(1, Hd).astype(jnp.float32)
    g2 = gamma.reshape(1, Hd).astype(jnp.float32)
    beta2 = beta.reshape(1, Hd).astype(jnp.float32)
    itemsize = h.dtype.itemsize
    cost = pl.CostEstimate(
        flops=2 * rows_pad * K * Hd + 10 * rows_pad * Hd,
        transcendentals=rows_pad,   # one rsqrt per row
        bytes_accessed=(rows_pad * K + 2 * rows_pad * Hd) * itemsize
                       + w.size * w.dtype.itemsize + 3 * Hd * 4)
    out = pl.pallas_call(
        functools.partial(_dense_residual_ln_kernel, eps=eps),
        out_shape=jax.ShapeDtypeStruct((rows_pad, Hd), x.dtype),
        grid_spec=pltpu.PrefetchScalarGridSpec(
            num_scalar_prefetch=0,
            grid=(rows_pad // tile,),
            in_specs=[
                pl.BlockSpec((tile, K), lambda i: (i, 0)),    # projected activations
                pl.BlockSpec((tile, Hd), lambda i: (i, 0)),   # residual input
                _resident_spec((K, Hd)),                      # weight (resident, native dtype)
                _resident_spec((1, Hd)),                      # bias (f32)
                _resident_spec((1, Hd)),                      # LN gamma (f32)
                _resident_spec((1, Hd)),                      # LN beta (f32)
            ],
            out_specs=pl.BlockSpec((tile, Hd), lambda i: (i, 0)),
        ),
        compiler_params=_compiler_params(1),
        cost_estimate=cost,
    )(h, x, w, b2, g2, beta2)
    return out if rows_pad == rows else out[:rows]


def _pallas_ffn(x, w_i, b_i, w_o, b_o, gamma, beta, *, eps, row_tile=None):
    # Fused BertIntermediate + BertOutput (+ residual + LayerNorm).
    rows, Hd = x.shape
    I = w_i.shape[1]
    tile, rows_pad = _row_tiling(rows, row_tile if row_tile else _default_row_tile())
    if rows_pad != rows:
        x = jnp.pad(x, ((0, rows_pad - rows), (0, 0)))
    bi2 = b_i.reshape(1, I).astype(jnp.float32)
    bo2 = b_o.reshape(1, Hd).astype(jnp.float32)
    g2 = gamma.reshape(1, Hd).astype(jnp.float32)
    beta2 = beta.reshape(1, Hd).astype(jnp.float32)
    itemsize = x.dtype.itemsize
    cost = pl.CostEstimate(
        flops=4 * rows_pad * Hd * I + 10 * rows_pad * Hd,
        transcendentals=rows_pad * I + rows_pad,
        bytes_accessed=2 * rows_pad * Hd * itemsize
                       + (w_i.size * w_i.dtype.itemsize + w_o.size * w_o.dtype.itemsize)
                       + (I + 3 * Hd) * 4)
    out = pl.pallas_call(
        functools.partial(_ffn_kernel, eps=eps),
        out_shape=jax.ShapeDtypeStruct((rows_pad, Hd), x.dtype),
        grid_spec=pltpu.PrefetchScalarGridSpec(
            num_scalar_prefetch=0,
            grid=(rows_pad // tile,),
            in_specs=[
                pl.BlockSpec((tile, Hd), lambda i: (i, 0)),   # attention output row tile
                _resident_spec((Hd, I)),                      # intermediate weight
                _resident_spec((1, I)),                       # intermediate bias (f32)
                _resident_spec((I, Hd)),                      # output weight
                _resident_spec((1, Hd)),                      # output bias (f32)
                _resident_spec((1, Hd)),                      # LN gamma (f32)
                _resident_spec((1, Hd)),                      # LN beta (f32)
            ],
            out_specs=pl.BlockSpec((tile, Hd), lambda i: (i, 0)),
        ),
        compiler_params=_compiler_params(1),
        cost_estimate=cost,
    )(x, w_i, bi2, w_o, bo2, g2, beta2)
    return out if rows_pad == rows else out[:rows]


def _pallas_attention(qkv, mask_b1s, *, num_heads, head_dim, scale):
    # qkv: (B, S, 3H) fused projection; mask_b1s: (B, 1, S) additive f32; returns (B, S, H).
    B, S, threeH = qkv.shape
    H = num_heads * head_dim
    itemsize = qkv.dtype.itemsize
    cost = pl.CostEstimate(
        flops=4 * B * num_heads * S * S * head_dim,
        transcendentals=B * num_heads * S * S,
        bytes_accessed=B * S * (threeH + H) * itemsize + B * S * 4)
    return pl.pallas_call(
        functools.partial(_attention_kernel, num_heads=num_heads,
                          head_dim=head_dim, scale=scale),
        out_shape=jax.ShapeDtypeStruct((B, S, H), qkv.dtype),
        grid_spec=pltpu.PrefetchScalarGridSpec(
            num_scalar_prefetch=0,
            grid=(B,),
            in_specs=[
                pl.BlockSpec((1, S, threeH), lambda b: (b, 0, 0)),  # one batch's fused QKV slab
                pl.BlockSpec((1, 1, S), lambda b: (b, 0, 0)),       # per-batch additive mask
            ],
            out_specs=pl.BlockSpec((1, S, H), lambda b: (b, 0, 0)),
        ),
        compiler_params=_compiler_params(1),
        cost_estimate=cost,
    )(qkv, mask_b1s)


# ---------------------------------------------------------------------------
# Parameter preparation / BertLayer / BertEncoder composition
# ---------------------------------------------------------------------------

def fuse_qkv_params(lp):
    """Pre-fuse Q/K/V projection weights & biases (do this ONCE at load time, not per forward)."""
    if "w_qkv" in lp:
        return lp
    lp = dict(lp)
    lp["w_qkv"] = jnp.concatenate([lp["wq"], lp["wk"], lp["wv"]], axis=1)
    lp["b_qkv"] = jnp.concatenate([lp["bq"], lp["bk"], lp["bv"]], axis=0)
    return lp


def _bert_layer(hidden2d, mask_b1s, lp, *, batch, seq, num_heads, eps, row_tile):
    H = hidden2d.shape[-1]
    dh = H // num_heads
    # Fused QKV projection: one [H, 3H] matmul instead of three [H, H] matmuls.
    qkv = _pallas_dense(hidden2d, lp["w_qkv"], lp["b_qkv"], act=None, row_tile=row_tile)
    # Attention reads the fused QKV directly (no split / head transposes through HBM).
    ctx = _pallas_attention(qkv.reshape(batch, seq, 3 * H), mask_b1s,
                            num_heads=num_heads, head_dim=dh,
                            scale=1.0 / math.sqrt(dh))
    ctx2d = ctx.reshape(batch * seq, H)
    # BertSelfOutput: dense + dropout(id) + residual + LayerNorm
    attn_out = _pallas_dense_residual_ln(ctx2d, hidden2d, lp["w_ao"], lp["b_ao"],
                                         lp["ln1_g"], lp["ln1_b"],
                                         eps=eps, row_tile=row_tile)
    # BertIntermediate + BertOutput fused: dense + GELU + dense + dropout(id) + residual + LN
    return _pallas_ffn(attn_out, lp["w_i"], lp["b_i"], lp["w_o"], lp["b_o"],
                       lp["ln2_g"], lp["ln2_b"], eps=eps, row_tile=row_tile)


def bert_encoder(hidden_states, layer_params, attention_mask=None, *,
                 num_heads, eps=1e-12, row_tile=None, mask_is_additive=True):
    """Eval-mode BertEncoder forward.

    hidden_states: [B, S, H].  attention_mask: optional [B, S]; if mask_is_additive it is the
    HF extended additive mask (0 = keep, large negative = mask), otherwise a 0/1 keep-mask that
    is converted here.  Linear weights are stored pre-transposed as [in_features, out_features].
    TODO(synk): head_mask, cross-attention (encoder_hidden_states), output_attentions /
                output_hidden_states tuples and gradient checkpointing are not implemented.
    """
    B, S, H = hidden_states.shape
    assert H % num_heads == 0, "hidden dim must divide num_heads"
    if row_tile is None:
        row_tile = _default_row_tile()
    # Prefer pre-fused params (fuse_qkv_params at load time); fuse lazily if not done yet.
    layer_params = [fuse_qkv_params(lp) for lp in layer_params]
    if attention_mask is None:
        mask_b1s = jnp.zeros((B, 1, S), dtype=jnp.float32)
    else:
        m = attention_mask.reshape(B, S).astype(jnp.float32)
        if not mask_is_additive:
            m = (1.0 - m) * -1e9          # HF-style 1=keep / 0=mask -> additive
        mask_b1s = m.reshape(B, 1, S)
    h2d = hidden_states.reshape(B * S, H)
    for lp in layer_params:
        h2d = _bert_layer(h2d, mask_b1s, lp, batch=B, seq=S,
                          num_heads=num_heads, eps=eps, row_tile=row_tile)
    return h2d.reshape(B, S, H)


# ---------------------------------------------------------------------------
# Self-test
# ---------------------------------------------------------------------------

if __name__ == "__main__":
    # Small config: batch=2, seq=8, hidden=32, heads=2 (head_dim=16), intermediate=64, 2 layers.
    B, S, H = 2, 8, 32
    num_heads = 2
    intermediate = 64
    num_layers = 2
    eps = 1e-12

    key = jax.random.PRNGKey(0)
    key, k_in = jax.random.split(key)
    hidden_states = jax.random.normal(k_in, (B, S, H), dtype=jnp.float32)

    # Additive attention mask: mask out the last two tokens of batch 1.
    attn_mask = jnp.zeros((B, S), dtype=jnp.float32)
    attn_mask = attn_mask.at[1, S - 2:].set(-1e9)

    def init_layer(k):
        ks = jax.random.split(k, 12)
        s = 0.02
        return {
            "wq": jax.random.normal(ks[0], (H, H), jnp.float32) * s,
            "bq": jax.random.normal(ks[1], (H,), jnp.float32) * s,
            "wk": jax.random.normal(ks[2], (H, H), jnp.float32) * s,
            "bk": jax.random.normal(ks[3], (H,), jnp.float32) * s,
            "wv": jax.random.normal(ks[4], (H, H), jnp.float32) * s,
            "bv": jax.random.normal(ks[5], (H,), jnp.float32) * s,
            "w_ao": jax.random.normal(ks[6], (H, H), jnp.float32) * s,
            "b_ao": jax.random.normal(ks[7], (H,), jnp.float32) * s,
            "w_i": jax.random.normal(ks[8], (H, intermediate), jnp.float32) * s,
            "b_i": jax.random.normal(ks[9], (intermediate,), jnp.float32) * s,
            "w_o": jax.random.normal(ks[10], (intermediate, H), jnp.float32) * s,
            "b_o": jax.random.normal(ks[11], (H,), jnp.float32) * s,
            "ln1_g": jnp.ones((H,), jnp.float32),
            "ln1_b": jnp.zeros((H,), jnp.float32),
            "ln2_g": jnp.ones((H,), jnp.float32),
            "ln2_b": jnp.zeros((H,), jnp.float32),
        }

    layer_keys = jax.random.split(key, num_layers)
    params = [init_layer(k) for k in layer_keys]
    # Pre-fuse QKV once (load-time), not per forward.
    params = [fuse_qkv_params(p) for p in params]

    out = bert_encoder(hidden_states, params, attention_mask=attn_mask,
                       num_heads=num_heads, eps=eps)
    jax.block_until_ready(out)

    # ---------------- Pure-JAX reference ----------------
    def ref_layer_norm(z, g, b):
        m = z.mean(-1, keepdims=True)
        c = z - m
        v = (c * c).mean(-1, keepdims=True)
        return c * lax.rsqrt(v + eps) * g + b

    def ref_encoder(h):
        dh = H // num_heads
        x = h
        for lp in params:
            x2 = x.reshape(B * S, H)
            q = x2 @ lp["wq"] + lp["bq"]
            k_ = x2 @ lp["wk"] + lp["bk"]
            v_ = x2 @ lp["wv"] + lp["bv"]

            def heads(t):
                return t.reshape(B, S, num_heads, dh).transpose(0, 2, 1, 3)

            sc = jnp.einsum("bhqd,bhkd->bhqk", heads(q), heads(k_)) / math.sqrt(dh)
            sc = sc + attn_mask[:, None, None, :]
            p = jax.nn.softmax(sc, axis=-1)
            ctx = jnp.einsum("bhqk,bhkd->bhqd", p, heads(v_))
            ctx2 = ctx.transpose(0, 2, 1, 3).reshape(B * S, H)
            a = ref_layer_norm(ctx2 @ lp["w_ao"] + lp["b_ao"] + x2,
                               lp["ln1_g"], lp["ln1_b"])
            i = _gelu_tanh(a @ lp["w_i"] + lp["b_i"])
            o = ref_layer_norm(i @ lp["w_o"] + lp["b_o"] + a,
                               lp["ln2_g"], lp["ln2_b"])
            x = o.reshape(B, S, H)
        return x

    ref = ref_encoder(hidden_states)
    assert jnp.allclose(out, ref, atol=1e-4, rtol=1e-4), (
        f"mismatch vs reference: max abs diff {jnp.max(jnp.abs(out - ref))}")

    print("KERNEL_OK")
</pallas_src>

<mosaic_0001>
module attributes {stable_mosaic.version = 11 : i64} {
  func.func @_k(%arg0: i32, %arg1: memref<8x128xf32, #tpu.memory_space<vmem>>, %arg2: memref<8x128xf32, #tpu.memory_space<vmem>>) attributes {dimension_semantics = [#tpu.dimension_semantics<arbitrary>], iteration_bounds = array<i64: 1>, scalar_prefetch = 0 : i64, scratch_operands = 0 : i64, tpu.core_type = #tpu.core_type<tc>, window_params = [{pipeline_mode = #tpu.pipeline_mode<synchronous>, transform_indices = @transform_0, window_bounds = array<i64: 8, 128>}, {pipeline_mode = #tpu.pipeline_mode<synchronous>, transform_indices = @transform_1, window_bounds = array<i64: 8, 128>}]} {
    %c0 = arith.constant 0 : index
    %c0_0 = arith.constant 0 : index
    %0 = vector.load %arg1[%c0, %c0_0] : memref<8x128xf32, #tpu.memory_space<vmem>>, vector<8x128xf32>
    %cst = arith.constant 1.000000e+00 : f32
    %1 = vector.broadcast %cst : f32 to vector<8x128xf32>
    %2 = arith.addf %0, %1 : vector<8x128xf32>
    %c0_1 = arith.constant 0 : index
    %c0_2 = arith.constant 0 : index
    %3 = vector.load %arg2[%c0_1, %c0_2] : memref<8x128xf32, #tpu.memory_space<vmem>>, vector<8x128xf32>
    tpu.vector_store %arg2[%c0_1, %c0_2], %2 {strides = array<i32>} : memref<8x128xf32, #tpu.memory_space<vmem>>, vector<8x128xf32>,
    return
  }
  func.func @transform_0(%arg0: i32) -> (i32, i32) {
    %c0_i32 = arith.constant 0 : i32
    %c0_i32_0 = arith.constant 0 : i32
    %c0_i32_1 = arith.constant 0 : i32
    return %c0_i32, %c0_i32_0 : i32, i32
  }
  func.func @transform_1(%arg0: i32) -> (i32, i32) {
    %c0_i32 = arith.constant 0 : i32
    %c0_i32_0 = arith.constant 0 : i32
    %c0_i32_1 = arith.constant 0 : i32
    return %c0_i32, %c0_i32_0 : i32, i32
  }
}

module attributes {stable_mosaic.version = 11 : i64} {
  func.func @_dense_kernel(%arg0: i32, %arg1: memref<16x32xf32, #tpu.memory_space<vmem>>, %arg2: memref<32x96xf32, #tpu.memory_space<vmem>>, %arg3: memref<1x96xf32, #tpu.memory_space<vmem>>, %arg4: memref<16x96xf32, #tpu.memory_space<vmem>>) attributes {dimension_semantics = [#tpu.dimension_semantics<parallel>], iteration_bounds = array<i64: 1>, scalar_prefetch = 0 : i64, scratch_operands = 0 : i64, tpu.core_type = #tpu.core_type<tc>, window_params = [{transform_indices = @transform_0, window_bounds = array<i64: 16, 32>}, {pipeline_mode = #tpu.pipeline_mode<synchronous>, transform_indices = @transform_1, window_bounds = array<i64: 32, 96>}, {pipeline_mode = #tpu.pipeline_mode<synchronous>, transform_indices = @transform_2, window_bounds = array<i64: 1, 96>}, {transform_indices = @transform_3, window_bounds = array<i64: 16, 96>}]} {
    %c0 = arith.constant 0 : index
    %c0_0 = arith.constant 0 : index
    %0 = vector.load %arg1[%c0, %c0_0] : memref<16x32xf32, #tpu.memory_space<vmem>>, vector<16x32xf32>
    %c0_1 = arith.constant 0 : index
    %c0_2 = arith.constant 0 : index
    %1 = vector.load %arg2[%c0_1, %c0_2] : memref<32x96xf32, #tpu.memory_space<vmem>>, vector<32x96xf32>
    %cst = arith.constant dense<0.000000e+00> : vector<16x96xf32>
    %2 = tpu.matmul %0, %1, %cst {dimension_numbers = #tpu.dot_dimension_numbers<[1], [0], [0], [1], [0, 0, 1, 1], [], []>} : vector<16x32xf32>, vector<32x96xf32>, vector<16x96xf32> -> vector<16x96xf32>
    %c0_3 = arith.constant 0 : index
    %c0_4 = arith.constant 0 : index
    %3 = vector.load %arg3[%c0_3, %c0_4] : memref<1x96xf32, #tpu.memory_space<vmem>>, vector<1x96xf32>
    %4 = vector.broadcast %3 : vector<1x96xf32> to vector<16x96xf32>
    %5 = arith.addf %2, %4 : vector<16x96xf32>
    %c0_5 = arith.constant 0 : index
    %c0_6 = arith.constant 0 : index
    %6 = vector.load %arg4[%c0_5, %c0_6] : memref<16x96xf32, #tpu.memory_space<vmem>>, vector<16x96xf32>
    tpu.vector_store %arg4[%c0_5, %c0_6], %5 {strides = array<i32>} : memref<16x96xf32, #tpu.memory_space<vmem>>, vector<16x96xf32>,
    return
  }
  func.func @transform_0(%arg0: i32) -> (i32, i32) {
    %c0_i32 = arith.constant 0 : i32
    %c0_i32_0 = arith.constant 0 : i32
    return %arg0, %c0_i32 : i32, i32
  }
  func.func @transform_1(%arg0: i32) -> (i32, i32) {
    %c0_i32 = arith.constant 0 : i32
    %c0_i32_0 = arith.constant 0 : i32
    %c0_i32_1 = arith.constant 0 : i32
    return %c0_i32, %c0_i32_0 : i32, i32
  }
  func.func @transform_2(%arg0: i32) -> (i32, i32) {
    %c0_i32 = arith.constant 0 : i32
    %c0_i32_0 = arith.constant 0 : i32
    %c0_i32_1 = arith.constant 0 : i32
    return %c0_i32, %c0_i32_0 : i32, i32
  }
  func.func @transform_3(%arg0: i32) -> (i32, i32) {
    %c0_i32 = arith.constant 0 : i32
    %c0_i32_0 = arith.constant 0 : i32
    return %arg0, %c0_i32 : i32, i32
  }
}

</mosaic_0001>

<llo_original>
// kernel: tpu_custom_call.1
$region0: #{tpu_custom_call.1}
  #allocation0 [shape = 'u32[]', space=smem, size = 0x4, offset = 0x4, fixed_abs, tag = 'smem constant byte address 0x4 - core index']
  #allocation1 [shape = 'u32[144,128]{1,0:T(1,128)}', space=vmem, size = 0x12000, scoped, tag = 'internal scratch']
  %s0 = inlined_call_operand.hbm [shape: f32[8,128], index: 0, kind: input, shape index: {}]
  %s1 = inlined_call_operand.hbm [shape: f32[8,128], index: 1, kind: output, shape index: {}]
  %s2 = sld [smem:[#allocation0]]
  $region18: #{tpu_custom_call.1} parent=0
    _
  %s4 = ssub.s32 1, %s2
  %s5 = scalar_select 0, %s4, %s2
  $region1: #{tpu_custom_call.1} parent=0
    #allocation2 [shape = 'u8[4096]{0}', space=vmem, size = 0x1000, scoped, tag = 'input window, operand 0, single buffered']
    #allocation3 [shape = 's32[1]{0}', space=sflag, size = 0x4, scoped, tag = 'scoped memory for tpu_custom_call.1']
    #allocation4 [shape = 's32[1]{0}', space=sflag, size = 0x4, scoped, tag = 'scoped memory for tpu_custom_call.1']
    #allocation5 [shape = 'u8[4096]{0}', space=vmem, size = 0x1000, scoped, tag = 'output window, operand 0, single buffered']
    %6 = vsyncpa [#allocation3], 0
    %7 = vsyncpa [#allocation4], 0
    // Predicated region
    $region2: #{tpu_custom_call.1} parent=1 // pred_check
      _
    $region3: #{tpu_custom_call.1} parent=1 // pred_check_branch
      %9 = sbr.rel (0) target = $region5
    $region4: #{tpu_custom_call.1} parent=1 // pred_region
      %s11 = ssub.s32 128, 128
      %12 = vsyncadd [#allocation3], %s11
      %s14 = sshll.u32 [#allocation2], 4
      %s15 = int_to_ptr.vmem [resolvable:$true] %s14
      %17 = dma.hbm_to_vmem [thread:$0]  %s0, 128, %s15, [#allocation3]
    $region5: #{tpu_custom_call.1} parent=1 // pred_fallthru
      _
    // Predicated region
    $region6: #{tpu_custom_call.1} parent=1 // pred_check
      _
    $region7: #{tpu_custom_call.1} parent=1 // pred_check_branch
      %19 = sbr.rel (0) target = $region9
    $region8: #{tpu_custom_call.1} parent=1 // pred_region
      %20 = dma.done [#allocation3], 128
    $region9: #{tpu_custom_call.1} parent=1 // pred_fallthru
      _
    %v21 = vld [vmem:[#allocation2] sm:$0xff]
    %v22 = vadd.f32 %v21, 1.0
    %23 = vst [vmem:[#allocation5] sm:$0xff] %v22
    // Predicated region
    $region10: #{tpu_custom_call.1} parent=1 // pred_check
      _
    $region11: #{tpu_custom_call.1} parent=1 // pred_check_branch
      %25 = sbr.rel (0) target = $region13
    $region12: #{tpu_custom_call.1} parent=1 // pred_region
      %s27 = ssub.s32 128, 128
      %28 = vsyncadd [#allocation4], %s27
      %s30 = sshll.u32 [#allocation5], 4
      %s31 = int_to_ptr.vmem [resolvable:$true] %s30
      %33 = dma.vmem_to_hbm [thread:$0]  %s31, 128, %s1, [#allocation4]
    $region13: #{tpu_custom_call.1} parent=1 // pred_fallthru
      _
    // Predicated region
    $region14: #{tpu_custom_call.1} parent=1 // pred_check
      _
    $region15: #{tpu_custom_call.1} parent=1 // pred_check_branch
      %35 = sbr.rel (0) target = $region17
    $region16: #{tpu_custom_call.1} parent=1 // pred_region
      %36 = dma.done [#allocation4], 128
    $region17: #{tpu_custom_call.1} parent=1 // pred_fallthru
      _
    %37 = vsyncpa [#allocation3], 1
    %38 = vsyncpa [#allocation4], 1

// kernel: tpu_custom_call.1
$region0: #{tpu_custom_call.1}
  #allocation0 [shape = 'u32[]', space=smem, size = 0x4, offset = 0x4, fixed_abs, tag = 'smem constant byte address 0x4 - core index']
  #allocation1 [shape = 'u32[144,128]{1,0:T(1,128)}', space=vmem, size = 0x12000, scoped, tag = 'internal scratch']
  %s0 = inlined_call_operand.hbm [shape: f32[16,32], index: 0, kind: input, shape index: {}]
  %s1 = inlined_call_operand.hbm [shape: f32[32,96], index: 1, kind: input, shape index: {}]
  %s2 = inlined_call_operand.vmem [shape: f32[1,96], index: 2, kind: input, shape index: {}]
  %s3 = inlined_call_operand.hbm [shape: f32[16,96], index: 3, kind: output, shape index: {}]
  %s4 = sld [smem:[#allocation0]]
  $region30: #{tpu_custom_call.1} parent=0
    _
  %s6 = ssub.s32 1, %s4
  %s7 = scalar_select 0, %s6, %s4
  $region1: #{tpu_custom_call.1} parent=0
    #allocation2 [shape = 'u8[8192]{0}', space=vmem, size = 0x2000, scoped, tag = 'input window, operand 0, single buffered']
    #allocation3 [shape = 's32[1]{0}', space=sflag, size = 0x4, scoped, tag = 'scoped memory for tpu_custom_call.1']
    #allocation4 [shape = 's32[1]{0}', space=sflag, size = 0x4, scoped, tag = 'scoped memory for tpu_custom_call.1']
    #allocation5 [shape = 'u8[16384]{0}', space=vmem, size = 0x4000, scoped, tag = 'input window, operand 1, single buffered']
    #allocation6 [shape = 's32[1]{0}', space=sflag, size = 0x4, scoped, tag = 'scoped memory for tpu_custom_call.1']
    #allocation7 [shape = 'u8[8192]{0}', space=vmem, size = 0x2000, scoped, tag = 'output window, operand 0, single buffered']
    %8 = vsyncpa [#allocation3], 0
    %9 = vsyncpa [#allocation6], 0
    %10 = vsyncpa [#allocation4], 0
    // Predicated region
    $region2: #{tpu_custom_call.1} parent=1 // pred_check
      _
    $region3: #{tpu_custom_call.1} parent=1 // pred_check_branch
      %12 = sbr.rel (0) target = $region5
    $region4: #{tpu_custom_call.1} parent=1 // pred_region
      %s14 = ssub.s32 256, 256
      %15 = vsyncadd [#allocation3], %s14
      %s16 = sshll.u32 [#allocation2], 4
      %s17 = int_to_ptr.vmem [resolvable:$true] %s16
      %22 = dma.hbm_to_vmem [thread:$0]  %s0, 256, %s17, [#allocation3], 128, 128, 8
    $region5: #{tpu_custom_call.1} parent=1 // pred_fallthru
      _
    // Predicated region
    $region6: #{tpu_custom_call.1} parent=1 // pred_check
      _
    $region7: #{tpu_custom_call.1} parent=1 // pred_check_branch
      %24 = sbr.rel (0) target = $region9
    $region8: #{tpu_custom_call.1} parent=1 // pred_region
      %s26 = ssub.s32 512, 512
      %27 = vsyncadd [#allocation6], %s26
      %s28 = sshll.u32 [#allocation5], 4
      %s29 = int_to_ptr.vmem [resolvable:$true] %s28
      %34 = dma.hbm_to_vmem [thread:$0]  %s1, 512, %s29, [#allocation6], 128, 128, 8
    $region9: #{tpu_custom_call.1} parent=1 // pred_fallthru
      _
    // Predicated region
    $region10: #{tpu_custom_call.1} parent=1 // pred_check
      _
    $region11: #{tpu_custom_call.1} parent=1 // pred_check_branch
      %36 = sbr.rel (0) target = $region13
    $region12: #{tpu_custom_call.1} parent=1 // pred_region
      _
    $region13: #{tpu_custom_call.1} parent=1 // pred_fallthru
      _
    // Predicated region
    $region14: #{tpu_custom_call.1} parent=1 // pred_check
      _
    $region15: #{tpu_custom_call.1} parent=1 // pred_check_branch
      %38 = sbr.rel (0) target = $region17
    $region16: #{tpu_custom_call.1} parent=1 // pred_region
      %39 = dma.done [#allocation3], 256
    $region17: #{tpu_custom_call.1} parent=1 // pred_fallthru
      _
    // Predicated region
    $region18: #{tpu_custom_call.1} parent=1 // pred_check
      _
    $region19: #{tpu_custom_call.1} parent=1 // pred_check_branch
      %41 = sbr.rel (0) target = $region21
    $region20: #{tpu_custom_call.1} parent=1 // pred_region
      %42 = dma.done [#allocation6], 512
    $region21: #{tpu_custom_call.1} parent=1 // pred_fallthru
      _
    %v43 = vld [vmem:[#allocation2] sm:$0xff]
    %v44 = vld [vmem:[#allocation2 + $0x8] sm:$0xff]
    %v45 = vld [vmem:[#allocation5] sm:$0xff]
    %v46 = vld [vmem:[#allocation5 + $0x8] sm:$0xff]
    %v47 = vld [vmem:[#allocation5 + $0x10] sm:$0xff]
    %v48 = vld [vmem:[#allocation5 + $0x18] sm:$0xff]
    %v49 = vld [vmem:[%s2] sm:$0x1]
    %v51 = vlaneseq
    %v52 = vshrl.u32 %v51, 7
    %v53 = vsub.s32 0, %v52
    %v54 = vrot.slane %v49, %v53
    %vm56 = vcmask 261120
    %v58 = vsel %vm56, %v43, 0
    %v61 = vsel %vm56, %v44, 0
    %63 = vmatprep.subr.mxu0 0.0
    %64 = vmatpush1.msra.mxu0 0.0
    %65 = vmatprep.subr.mxu0 0.0
    %66 = vmatpush1.msra.mxu0 0.0
    %67 = vmatprep.subr.mxu0 0.0
    %68 = vmatpush1.msra.mxu0 0.0
    %69 = vmatprep.subr.mxu0 0.0
    %70 = vmatpush1.msra.mxu0 0.0
    %71 = vmatprep.subr.mxu0 0.0
    %72 = vmatpush1.msra.mxu0 0.0
    %73 = vmatprep.subr.mxu0 0.0
    %74 = vmatpush1.msra.mxu0 0.0
    %75 = vmatprep.subr.mxu0 0.0
    %76 = vmatpush1.msra.mxu0 0.0
    %77 = vmatprep.subr.mxu0 0.0
    %78 = vmatpush1.msra.mxu0 0.0
    %79 = vmatprep.subr.mxu0 0.0
    %80 = vmatpush1.msra.mxu0 0.0
    %81 = vmatprep.subr.mxu0 0.0
    %82 = vmatpush1.msra.mxu0 0.0
    %83 = vmatprep.subr.mxu0 0.0
    %84 = vmatpush1.msra.mxu0 0.0
    %85 = vmatprep.subr.mxu0 0.0
    %86 = vmatpush1.msra.mxu0 0.0
    %87 = vmatprep.subr.mxu0 0.0
    %88 = vmatpush1.msra.mxu0 %v48
    %89 = vmatprep.subr.mxu0 0.0
    %90 = vmatpush1.msra.mxu0 %v47
    %91 = vmatprep.subr.mxu0 0.0
    %92 = vmatpush1.msra.mxu0 %v46
    %93 = vmatprep.subr.mxu0 0.0
    %94 = vmatpush1.msra.mxu0 %v45
    %95 = vmatprep.subr.mxu0 0.0
    %96 = vmatpush2.msra.mxu0 0.0
    %97 = vmatprep.subr.mxu0 0.0
    %98 = vmatpush2.msra.mxu0 0.0
    %99 = vmatprep.subr.mxu0 0.0
    %100 = vmatpush2.msra.mxu0 0.0
    %101 = vmatprep.subr.mxu0 0.0
    %102 = vmatpush2.msra.mxu0 0.0
    %103 = vmatprep.subr.mxu0 0.0
    %104 = vmatpush2.msra.mxu0 0.0
    %105 = vmatprep.subr.mxu0 0.0
    %106 = vmatpush2.msra.mxu0 0.0
    %107 = vmatprep.subr.mxu0 0.0
    %108 = vmatpush2.msra.mxu0 0.0
    %109 = vmatprep.subr.mxu0 0.0
    %110 = vmatpush2.msra.mxu0 0.0
    %111 = vmatprep.subr.mxu0 0.0
    %112 = vmatpush2.msra.mxu0 0.0
    %113 = vmatprep.subr.mxu0 0.0
    %114 = vmatpush2.msra.mxu0 0.0
    %115 = vmatprep.subr.mxu0 0.0
    %116 = vmatpush2.msra.mxu0 0.0
    %117 = vmatprep.subr.mxu0 0.0
    %118 = vmatpush2.msra.mxu0 0.0
    %119 = vmatprep.subr.mxu0 0.0
    %120 = vmatpush2.msra.mxu0 0.0
    %121 = vmatprep.subr.mxu0 0.0
    %122 = vmatpush2.msra.mxu0 0.0
    %123 = vmatprep.subr.mxu0 0.0
    %124 = vmatpush2.msra.mxu0 0.0
    %125 = vmatprep.subr.mxu0 0.0
    %126 = vmatpush2.msra.mxu0 0.0
    %127 = vmatprep.mubr.f32.mxu0 0.0
    %128 = vmatmul.mubr.f32.gmra.mxu0 %v58
    %v129 = vpop.f32.mrf.mxu0
    %v130 = vadd.f32 %v54, %v129
    %v131 = vpop.f32.mrf.mxu0
    %132 = vmatprep.mubr.f32.mxu0 0.0
    %133 = vmatmul.mubr.f32.gmra.mxu0 %v61
    %v134 = vpop.f32.mrf.mxu0
    %v135 = vadd.f32 %v54, %v134
    %v136 = vpop.f32.mrf.mxu0
    %137 = vdwg.mxu0
    %vm138 = vcmask 785408
    %139 = vst.msk [vmem:[#allocation7] sm:$0xff] %vm138, %v130
    %140 = vst.msk [vmem:[#allocation7 + $0x8] sm:$0xff] %vm138, %v135
    // Predicated region
    $region22: #{tpu_custom_call.1} parent=1 // pred_check
      _
    $region23: #{tpu_custom_call.1} parent=1 // pred_check_branch
      %142 = sbr.rel (0) target = $region25
    $region24: #{tpu_custom_call.1} parent=1 // pred_region
      %s144 = ssub.s32 256, 256
      %145 = vsyncadd [#allocation4], %s144
      %s146 = sshll.u32 [#allocation7], 4
      %s147 = int_to_ptr.vmem [resolvable:$true] %s146
      %152 = dma.vmem_to_hbm [thread:$0]  %s147, 256, %s3, [#allocation4], 128, 128, 8
    $region25: #{tpu_custom_call.1} parent=1 // pred_fallthru
      _
    // Predicated region
    $region26: #{tpu_custom_call.1} parent=1 // pred_check
      _
    $region27: #{tpu_custom_call.1} parent=1 // pred_check_branch
      %154 = sbr.rel (0) target = $region29
    $region28: #{tpu_custom_call.1} parent=1 // pred_region
      %155 = dma.done [#allocation4], 256
    $region29: #{tpu_custom_call.1} parent=1 // pred_fallthru
      _
    %156 = vsyncpa [#allocation3], 1
    %157 = vsyncpa [#allocation6], 1
    %158 = vsyncpa [#allocation4], 1

</llo_original>
